<compile_context>
chip_gen: v7x
topology: tpu7x:2x2x1
jax: 0.10.0
libtpu: 0.0.40
codegen_flags: <defaults>
</compile_context>

<pallas_src>
import jax
import jax.numpy as jnp
from jax.experimental import pallas as pl
from jax.experimental.pallas import tpu as pltpu


def _gam_kernel(x_ref, w1t_ref, b1_ref, w2t_ref, b2_ref, w3_ref, b3_ref,
                o_ref, gate_ref):
    # x_ref block: (Bb, C, P) with P = H*W lane-dense.
    Bb, C, P = x_ref.shape
    inv_p = 1.0 / P

    # ---- Squeeze-excite gate, batched over the Bb elements of this block ----
    pooled = jnp.sum(x_ref[...].astype(jnp.float32), axis=2) * inv_p     # (Bb, C)

    # conv1_1 + ReLU : (Bb, C) @ (C, C/2) -> (Bb, C/2)
    h = jnp.dot(pooled, w1t_ref[...], preferred_element_type=jnp.float32)
    h = jnp.maximum(h + b1_ref[...], 0.0)
    # conv1_2 + sigmoid : (Bb, C/2) @ (C/2, C) -> (Bb, C)
    z = jnp.dot(h, w2t_ref[...], preferred_element_type=jnp.float32) + b2_ref[...]
    # 1 + sigmoid(z); exact divide (tiny (Bb, C) array, numerics matter more
    # than the EUP slot here).
    gate = 1.0 + 1.0 / (1.0 + jnp.exp(-z))                               # (Bb, C)

    # Stash the per-element gate rows in scratch so the fori_loop below can
    # fetch them with a dynamic leading-axis index (always supported).
    for bi in range(Bb):                       # static Python loop, tiny (1, C) stores
        gate_ref[bi] = gate[bi:bi + 1, :]

    # ---- Per-element:  conv2(x + x*g)  ==  (W3 * (1+g)) @ x + b3 -----------
    def body(b, carry):
        d = gate_ref[b]                                          # (1, C)
        w3s = w3_ref[...] * d                                    # scale W3 columns
        xb = x_ref[b].astype(jnp.float32)                        # (C, P)
        out = jnp.dot(w3s, xb, preferred_element_type=jnp.float32) + b3_ref[...]
        o_ref[b] = out.astype(o_ref.dtype)
        return carry

    jax.lax.fori_loop(0, Bb, body, 0, unroll=Bb <= 8)


def _pick_block_batch(batch, elem_bytes, target_bytes=512 * 1024, min_grid=2):
    """Largest Bb dividing `batch` with Bb*elem_bytes <= target, keeping the
    grid >= min_grid steps (v7x megacore / pipeline overlap) when possible."""
    candidates = [bb for bb in range(1, batch + 1)
                  if batch % bb == 0 and bb * elem_bytes <= target_bytes]
    if not candidates:
        return 1
    good = [bb for bb in candidates if batch // bb >= min_grid]
    return max(good) if good else max(candidates)


def gam_forward(x, w1, b1, w2, b2, w3, b3, *, block_batch=None):
    """Forward pass of _GAM.

    x : (B, C, H, W)  NCHW
    w1: (C//2, C), b1: (C//2,)   -- conv1_1
    w2: (C, C//2), b2: (C,)      -- conv1_2
    w3: (C, C),    b3: (C,)      -- conv2
    returns (B, C, H, W)
    """
    B, C, H, W = x.shape
    P = H * W
    Ch = w1.shape[0]

    if block_batch is None:
        block_batch = _pick_block_batch(B, C * P * x.dtype.itemsize)
    Bb = block_batch
    assert B % Bb == 0, (B, Bb)
    grid = B // Bb

    x_p = x.reshape(B, C, P)                     # free reshape, no transpose
    # Pre-transpose the gate weights so the in-kernel gate path needs no
    # transposes; biases as broadcast-ready rows/columns.  All f32.
    w1t = jnp.asarray(w1, jnp.float32).T         # (C, Ch)
    w2t = jnp.asarray(w2, jnp.float32).T         # (Ch, C)
    w3f = jnp.asarray(w3, jnp.float32)           # (C, C)
    b1r = jnp.asarray(b1, jnp.float32).reshape(1, Ch)
    b2r = jnp.asarray(b2, jnp.float32).reshape(1, C)
    b3c = jnp.asarray(b3, jnp.float32).reshape(C, 1)

    out = pl.pallas_call(
        _gam_kernel,
        out_shape=jax.ShapeDtypeStruct((B, C, P), x.dtype),
        grid=(grid,),
        in_specs=[
            pl.BlockSpec((Bb, C, P), lambda g: (g, 0, 0)),   # x, Bb elements/step
            pl.BlockSpec((C, Ch), lambda g: (0, 0)),         # w1^T (resident)
            pl.BlockSpec((1, Ch), lambda g: (0, 0)),         # b1
            pl.BlockSpec((Ch, C), lambda g: (0, 0)),         # w2^T
            pl.BlockSpec((1, C), lambda g: (0, 0)),          # b2
            pl.BlockSpec((C, C), lambda g: (0, 0)),          # w3
            pl.BlockSpec((C, 1), lambda g: (0, 0)),          # b3
        ],
        out_specs=pl.BlockSpec((Bb, C, P), lambda g: (g, 0, 0)),
        scratch_shapes=[pltpu.VMEM((Bb, 1, C), jnp.float32)],   # per-element gates
        compiler_params=pltpu.CompilerParams(
            dimension_semantics=("parallel",)),
    )(x_p, w1t, b1r, w2t, b2r, w3f, b3c)
    return out.reshape(B, C, H, W)


def _gam_ref(x, w1, b1, w2, b2, w3, b3):
    """Pure-JAX reference mirroring the PyTorch module, for verification."""
    hp = jax.lax.Precision.HIGHEST
    pooled = jnp.mean(x, axis=(2, 3))                                  # avg_pool -> (B, C)
    h = jnp.maximum(jnp.dot(pooled, w1.T, precision=hp) + b1, 0.0)     # conv1_1 + relu
    g = jax.nn.sigmoid(jnp.dot(h, w2.T, precision=hp) + b2)            # conv1_2 + sigmoid
    y = x + x * g[:, :, None, None]                                    # x2 = x + x*x1
    out = jnp.einsum('oc,bchw->bohw', w3, y, precision=hp)             # conv2
    return out + b3[None, :, None, None]


if __name__ == "__main__":
    key = jax.random.PRNGKey(0)
    B, C, H, W = 2, 64, 16, 16
    Ch = C // 2
    ks = jax.random.split(key, 8)

    s1 = 1.0 / (C ** 0.5)
    s2 = 1.0 / (Ch ** 0.5)
    w1 = jax.random.normal(ks[1], (Ch, C), dtype=jnp.float32) * s1
    b1 = jax.random.normal(ks[2], (Ch,), dtype=jnp.float32) * s1
    w2 = jax.random.normal(ks[3], (C, Ch), dtype=jnp.float32) * s2
    b2 = jax.random.normal(ks[4], (C,), dtype=jnp.float32) * s2
    w3 = jax.random.normal(ks[5], (C, C), dtype=jnp.float32) * s1
    b3 = jax.random.normal(ks[6], (C,), dtype=jnp.float32) * s1

    # Primary small-shape check (B=2 -> Bb=1, grid=2).
    x = jax.random.normal(ks[0], (B, C, H, W), dtype=jnp.float32)
    out = jax.block_until_ready(gam_forward(x, w1, b1, w2, b2, w3, b3))
    ref = _gam_ref(x, w1, b1, w2, b2, w3, b3)
    assert out.shape == x.shape, out.shape
    err = float(jnp.max(jnp.abs(out - ref)))
    assert jnp.allclose(out, ref, atol=1e-3, rtol=1e-3), f"max abs err = {err}"

    # Secondary check exercising the batched-block path (B=16 -> Bb=8, grid=2).
    x2 = jax.random.normal(ks[7], (16, C, H, W), dtype=jnp.float32)
    out2 = jax.block_until_ready(gam_forward(x2, w1, b1, w2, b2, w3, b3))
    ref2 = _gam_ref(x2, w1, b1, w2, b2, w3, b3)
    err2 = float(jnp.max(jnp.abs(out2 - ref2)))
    assert jnp.allclose(out2, ref2, atol=1e-3, rtol=1e-3), f"max abs err = {err2}"

    print("KERNEL_OK")
</pallas_src>

<mosaic_0001>
module attributes {stable_mosaic.version = 11 : i64} {
  func.func @_gam_kernel(%arg0: i32, %arg1: memref<1x64x256xf32, #tpu.memory_space<vmem>>, %arg2: memref<64x32xf32, #tpu.memory_space<vmem>>, %arg3: memref<1x32xf32, #tpu.memory_space<vmem>>, %arg4: memref<32x64xf32, #tpu.memory_space<vmem>>, %arg5: memref<1x64xf32, #tpu.memory_space<vmem>>, %arg6: memref<64x64xf32, #tpu.memory_space<vmem>>, %arg7: memref<64x1xf32, #tpu.memory_space<vmem>>, %arg8: memref<1x64x256xf32, #tpu.memory_space<vmem>>, %arg9: memref<1x1x64xf32, #tpu.memory_space<vmem>>) attributes {dimension_semantics = [#tpu.dimension_semantics<parallel>], iteration_bounds = array<i64: 2>, scalar_prefetch = 0 : i64, scratch_operands = 1 : i64, tpu.core_type = #tpu.core_type<tc>, window_params = [{transform_indices = @transform_0, window_bounds = array<i64: 1, 64, 256>}, {pipeline_mode = #tpu.pipeline_mode<synchronous>, transform_indices = @transform_1, window_bounds = array<i64: 64, 32>}, {pipeline_mode = #tpu.pipeline_mode<synchronous>, transform_indices = @transform_2, window_bounds = array<i64: 1, 32>}, {pipeline_mode = #tpu.pipeline_mode<synchronous>, transform_indices = @transform_3, window_bounds = array<i64: 32, 64>}, {pipeline_mode = #tpu.pipeline_mode<synchronous>, transform_indices = @transform_4, window_bounds = array<i64: 1, 64>}, {pipeline_mode = #tpu.pipeline_mode<synchronous>, transform_indices = @transform_5, window_bounds = array<i64: 64, 64>}, {pipeline_mode = #tpu.pipeline_mode<synchronous>, transform_indices = @transform_6, window_bounds = array<i64: 64, 1>}, {transform_indices = @transform_7, window_bounds = array<i64: 1, 64, 256>}]} {
    %c0 = arith.constant 0 : index
    %c0_0 = arith.constant 0 : index
    %c0_1 = arith.constant 0 : index
    %0 = vector.load %arg1[%c0, %c0_0, %c0_1] : memref<1x64x256xf32, #tpu.memory_space<vmem>>, vector<1x64x256xf32>
    %cst = arith.constant dense<0.000000e+00> : vector<1x64xf32>
    %1 = vector.multi_reduction <add>, %0, %cst [2] : vector<1x64x256xf32> to vector<1x64xf32>
    %cst_2 = arith.constant 3.906250e-03 : f32
    %2 = vector.broadcast %cst_2 : f32 to vector<1x64xf32>
    %3 = arith.mulf %1, %2 : vector<1x64xf32>
    %c0_3 = arith.constant 0 : index
    %c0_4 = arith.constant 0 : index
    %4 = vector.load %arg2[%c0_3, %c0_4] : memref<64x32xf32, #tpu.memory_space<vmem>>, vector<64x32xf32>
    %cst_5 = arith.constant dense<0.000000e+00> : vector<1x32xf32>
    %5 = tpu.matmul %3, %4, %cst_5 {dimension_numbers = #tpu.dot_dimension_numbers<[1], [0], [0], [1], [0, 0, 1, 1], [], []>} : vector<1x64xf32>, vector<64x32xf32>, vector<1x32xf32> -> vector<1x32xf32>
    %c0_6 = arith.constant 0 : index
    %c0_7 = arith.constant 0 : index
    %6 = vector.load %arg3[%c0_6, %c0_7] : memref<1x32xf32, #tpu.memory_space<vmem>>, vector<1x32xf32>
    %7 = arith.addf %5, %6 : vector<1x32xf32>
    %cst_8 = arith.constant 0.000000e+00 : f32
    %8 = vector.broadcast %cst_8 : f32 to vector<1x32xf32>
    %9 = arith.maximumf %7, %8 : vector<1x32xf32>
    %c0_9 = arith.constant 0 : index
    %c0_10 = arith.constant 0 : index
    %10 = vector.load %arg4[%c0_9, %c0_10] : memref<32x64xf32, #tpu.memory_space<vmem>>, vector<32x64xf32>
    %cst_11 = arith.constant dense<0.000000e+00> : vector<1x64xf32>
    %11 = tpu.matmul %9, %10, %cst_11 {dimension_numbers = #tpu.dot_dimension_numbers<[1], [0], [0], [1], [0, 0, 1, 1], [], []>} : vector<1x32xf32>, vector<32x64xf32>, vector<1x64xf32> -> vector<1x64xf32>
    %c0_12 = arith.constant 0 : index
    %c0_13 = arith.constant 0 : index
    %12 = vector.load %arg5[%c0_12, %c0_13] : memref<1x64xf32, #tpu.memory_space<vmem>>, vector<1x64xf32>
    %13 = arith.addf %11, %12 : vector<1x64xf32>
    %cst_14 = arith.constant 0.000000e+00 : f32
    %14 = vector.broadcast %cst_14 : f32 to vector<1x64xf32>
    %15 = arith.subf %14, %13 : vector<1x64xf32>
    %16 = math.exp %15 : vector<1x64xf32>
    %cst_15 = arith.constant 1.000000e+00 : f32
    %17 = vector.broadcast %cst_15 : f32 to vector<1x64xf32>
    %18 = arith.addf %17, %16 : vector<1x64xf32>
    %cst_16 = arith.constant 1.000000e+00 : f32
    %19 = vector.broadcast %cst_16 : f32 to vector<1x64xf32>
    %20 = arith.divf %19, %18 : vector<1x64xf32>
    %cst_17 = arith.constant 1.000000e+00 : f32
    %21 = vector.broadcast %cst_17 : f32 to vector<1x64xf32>
    %22 = arith.addf %21, %20 : vector<1x64xf32>
    %c0_18 = arith.constant 0 : index
    %c0_19 = arith.constant 0 : index
    %c0_20 = arith.constant 0 : index
    %23 = vector.load %arg9[%c0_18, %c0_19, %c0_20] : memref<1x1x64xf32, #tpu.memory_space<vmem>>, vector<1x1x64xf32>
    %24 = vector.shape_cast %23 : vector<1x1x64xf32> to vector<1x64xf32>
    %25 = vector.shape_cast %22 : vector<1x64xf32> to vector<1x1x64xf32>
    tpu.vector_store %arg9[%c0_18, %c0_19, %c0_20], %25 {strides = array<i32>} : memref<1x1x64xf32, #tpu.memory_space<vmem>>, vector<1x1x64xf32>,
    %c0_i32 = arith.constant 0 : i32
    %26 = arith.index_cast %c0_i32 : i32 to index
    %c0_21 = arith.constant 0 : index
    %c0_22 = arith.constant 0 : index
    %27 = vector.load %arg9[%26, %c0_21, %c0_22] : memref<1x1x64xf32, #tpu.memory_space<vmem>>, vector<1x1x64xf32>
    %28 = vector.shape_cast %27 : vector<1x1x64xf32> to vector<1x64xf32>
    %c0_23 = arith.constant 0 : index
    %c0_24 = arith.constant 0 : index
    %29 = vector.load %arg6[%c0_23, %c0_24] : memref<64x64xf32, #tpu.memory_space<vmem>>, vector<64x64xf32>
    %30 = vector.broadcast %28 : vector<1x64xf32> to vector<64x64xf32>
    %31 = arith.mulf %29, %30 : vector<64x64xf32>
    %32 = arith.index_cast %c0_i32 : i32 to index
    %c0_25 = arith.constant 0 : index
    %c0_26 = arith.constant 0 : index
    %33 = vector.load %arg1[%32, %c0_25, %c0_26] : memref<1x64x256xf32, #tpu.memory_space<vmem>>, vector<1x64x256xf32>
    %34 = vector.shape_cast %33 : vector<1x64x256xf32> to vector<64x256xf32>
    %cst_27 = arith.constant dense<0.000000e+00> : vector<64x256xf32>
    %35 = tpu.matmul %31, %34, %cst_27 {dimension_numbers = #tpu.dot_dimension_numbers<[1], [0], [0], [1], [0, 0, 1, 1], [], []>} : vector<64x64xf32>, vector<64x256xf32>, vector<64x256xf32> -> vector<64x256xf32>
    %c0_28 = arith.constant 0 : index
    %c0_29 = arith.constant 0 : index
    %36 = vector.load %arg7[%c0_28, %c0_29] : memref<64x1xf32, #tpu.memory_space<vmem>>, vector<64x1xf32>
    %37 = vector.broadcast %36 : vector<64x1xf32> to vector<64x256xf32>
    %38 = arith.addf %35, %37 : vector<64x256xf32>
    %39 = arith.index_cast %c0_i32 : i32 to index
    %c0_30 = arith.constant 0 : index
    %c0_31 = arith.constant 0 : index
    %40 = vector.load %arg8[%39, %c0_30, %c0_31] : memref<1x64x256xf32, #tpu.memory_space<vmem>>, vector<1x64x256xf32>
    %41 = vector.shape_cast %40 : vector<1x64x256xf32> to vector<64x256xf32>
    %42 = vector.shape_cast %38 : vector<64x256xf32> to vector<1x64x256xf32>
    tpu.vector_store %arg8[%39, %c0_30, %c0_31], %42 {strides = array<i32>} : memref<1x64x256xf32, #tpu.memory_space<vmem>>, vector<1x64x256xf32>,
    %c1_i32 = arith.constant 1 : i32
    return
  }
  func.func @transform_0(%arg0: i32) -> (i32, i32, i32) {
    %c0_i32 = arith.constant 0 : i32
    %c0_i32_0 = arith.constant 0 : i32
    %c0_i32_1 = arith.constant 0 : i32
    return %arg0, %c0_i32, %c0_i32_0 : i32, i32, i32
  }
  func.func @transform_1(%arg0: i32) -> (i32, i32) {
    %c0_i32 = arith.constant 0 : i32
    %c0_i32_0 = arith.constant 0 : i32
    %c0_i32_1 = arith.constant 0 : i32
    return %c0_i32, %c0_i32_0 : i32, i32
  }
  func.func @transform_2(%arg0: i32) -> (i32, i32) {
    %c0_i32 = arith.constant 0 : i32
    %c0_i32_0 = arith.constant 0 : i32
    %c0_i32_1 = arith.constant 0 : i32
    return %c0_i32, %c0_i32_0 : i32, i32
  }
  func.func @transform_3(%arg0: i32) -> (i32, i32) {
    %c0_i32 = arith.constant 0 : i32
    %c0_i32_0 = arith.constant 0 : i32
    %c0_i32_1 = arith.constant 0 : i32
    return %c0_i32, %c0_i32_0 : i32, i32
  }
  func.func @transform_4(%arg0: i32) -> (i32, i32) {
    %c0_i32 = arith.constant 0 : i32
    %c0_i32_0 = arith.constant 0 : i32
    %c0_i32_1 = arith.constant 0 : i32
    return %c0_i32, %c0_i32_0 : i32, i32
  }
  func.func @transform_5(%arg0: i32) -> (i32, i32) {
    %c0_i32 = arith.constant 0 : i32
    %c0_i32_0 = arith.constant 0 : i32
    %c0_i32_1 = arith.constant 0 : i32
    return %c0_i32, %c0_i32_0 : i32, i32
  }
  func.func @transform_6(%arg0: i32) -> (i32, i32) {
    %c0_i32 = arith.constant 0 : i32
    %c0_i32_0 = arith.constant 0 : i32
    %c0_i32_1 = arith.constant 0 : i32
    return %c0_i32, %c0_i32_0 : i32, i32
  }
  func.func @transform_7(%arg0: i32) -> (i32, i32, i32) {
    %c0_i32 = arith.constant 0 : i32
    %c0_i32_0 = arith.constant 0 : i32
    %c0_i32_1 = arith.constant 0 : i32
    return %arg0, %c0_i32, %c0_i32_0 : i32, i32, i32
  }
}

</mosaic_0001>

<llo_original>
// kernel: tpu_custom_call.1
$region0: #{tpu_custom_call.1}
  #allocation0 [shape = 'u32[]', space=smem, size = 0x4, offset = 0x4, fixed_abs, tag = 'smem constant byte address 0x4 - core index']
  #allocation1 [shape = 'u32[144,128]{1,0:T(1,128)}', space=vmem, size = 0x12000, scoped, tag = 'internal scratch']
  #allocation2 [shape = 'f32[1,1,64]{2,1,0:T(1,128)}', space=vmem, size = 0x200, scoped, tag = 'scratch operand']
  %s0 = inlined_call_operand.hbm [shape: f32[2,64,256], index: 0, kind: input, shape index: {}]
  %s1 = inlined_call_operand.vmem [shape: f32[64,32], index: 1, kind: input, shape index: {}]
  %s2 = inlined_call_operand.vmem [shape: f32[1,32], index: 2, kind: input, shape index: {}]
  %s3 = inlined_call_operand.vmem [shape: f32[32,64], index: 3, kind: input, shape index: {}]
  %s4 = inlined_call_operand.vmem [shape: f32[1,64], index: 4, kind: input, shape index: {}]
  %s5 = inlined_call_operand.vmem [shape: f32[64,64], index: 5, kind: input, shape index: {}]
  %s6 = inlined_call_operand.vmem [shape: f32[64,1], index: 6, kind: input, shape index: {}]
  %s7 = inlined_call_operand.hbm [shape: f32[2,64,256], index: 7, kind: output, shape index: {}]
  %s8 = sld [smem:[#allocation0]]
  $region65: #{tpu_custom_call.1} parent=0
    _
  %s10 = ssub.s32 1, %s8
  %s11 = scalar_select 0, %s10, %s8
  $region1: #{tpu_custom_call.1} parent=0
    #allocation3 [shape = 'u8[131072]{0}', space=vmem, size = 0x20000, scoped, tag = 'input window, operand 0']
    #allocation4 [shape = 's32[2]{0}', space=sflag, size = 0x8, scoped, tag = 'scoped memory for tpu_custom_call.1']
    #allocation5 [shape = 's32[2]{0}', space=sflag, size = 0x8, scoped, tag = 'scoped memory for tpu_custom_call.1']
    #allocation6 [shape = 'u8[131072]{0}', space=vmem, size = 0x20000, scoped, tag = 'output window, operand 0']
    %12 = vsyncpa [#allocation4], 0
    %s13 = scalar_lea.sflag [#allocation4], 1
    %14 = vsyncpa %s13, 0
    %15 = vsyncpa [#allocation5], 0
    %s16 = scalar_lea.sflag [#allocation5], 1
    %17 = vsyncpa %s16, 0
    loop: start=0, step=1, limit=4
    $region2: #{tpu_custom_call.1} parent=1 // loop_pre_header
      _
    $region3: #{tpu_custom_call.1} parent=1 // loop_header
      %s19 = sphi 0, %s23
      %p20 = scmp.ge.s32.totalorder %s19, 4
      %s29 = sphi 0, %s31
      %s32 = sphi 0, %s29
      %s33 = sphi 0, %s32
      %s49 = sphi 0, %s33
      %s53 = sphi 0, %s53
      %s55 = sphi 0, %s53
      %s56 = sphi 0, %s55
      %s70 = sphi 0, %s56
      %s74 = sphi 0, %s74
      %s76 = sphi 0, %s74
      %s77 = sphi 0, %s76
      %s91 = sphi 0, %s77
      %s95 = sphi 0, %s95
      %s97 = sphi 0, %s95
      %s98 = sphi 0, %s97
      %s112 = sphi 0, %s98
      %s116 = sphi 0, %s116
      %s118 = sphi 0, %s116
      %s119 = sphi 0, %s118
      %s133 = sphi 0, %s119
      %s137 = sphi 0, %s137
      %s139 = sphi 0, %s137
      %s140 = sphi 0, %s139
      %s154 = sphi 0, %s140
      %s158 = sphi 0, %s158
      %s160 = sphi 0, %s158
      %s161 = sphi 0, %s160
      %s175 = sphi 0, %s161
      %s181 = sphi 0, %s183
      %s184 = sphi 0, %s181
      %s185 = sphi 0, %s184
      %s201 = sphi 0, %s185
    $region4: #{tpu_custom_call.1} parent=1 // loop_header_branch
      %22 = sbr.rel (%p20) target = $region8
    $region5: #{tpu_custom_call.1} parent=1 // loop_body
      %s24 = ssub.s32 %s19, 1
      %s25 = ssub.s32 %s19, 2
      %s26 = sadd.s32 %s19, 1
      %s27 = ssub.s32 %s19, %s26
      %p28 = scmp.eq.s32.totalorder %s27, 0
      %s30 = sadd.s32 %s29, 1
      %s31 = scalar_select %p28, %s29, %s30
      %p34 = pneg %p28
      %p35 = scmp.eq.s32.totalorder %s19, 1
      %p36 = por %p34, %p35
      %p37 = scmp.ne.s32.totalorder %s29, %s32
      %p38 = scmp.eq.s32.totalorder %s19, 0
      %p39 = por %p37, %p38
      %p40 = scmp.ne.s32.totalorder %s29, %s32
      %p41 = scmp.eq.s32.totalorder %s24, 1
      %p42 = por %p40, %p41
      %p43 = scmp.ne.s32.totalorder %s32, %s33
      %p44 = scmp.eq.s32.totalorder %s24, 0
      %p45 = por %p43, %p44
      %p46 = scmp.ne.s32.totalorder %s32, %s33
      %p47 = scmp.eq.s32.totalorder %s25, 1
      %p48 = por %p46, %p47
      %p50 = scmp.ne.s32.totalorder %s33, %s49
      %p51 = scmp.eq.s32.totalorder %s25, 0
      %p52 = por %p50, %p51
      %s54 = sadd.s32 %s53, 1
      %p57 = scmp.eq.s32.totalorder %s19, 1
      %p58 = scmp.ne.s32.totalorder %s53, %s55
      %p59 = scmp.eq.s32.totalorder %s19, 0
      %p60 = por %p58, %p59
      %p61 = scmp.ne.s32.totalorder %s53, %s55
      %p62 = scmp.eq.s32.totalorder %s24, 1
      %p63 = por %p61, %p62
      %p64 = scmp.ne.s32.totalorder %s55, %s56
      %p65 = scmp.eq.s32.totalorder %s24, 0
      %p66 = por %p64, %p65
      %p67 = scmp.ne.s32.totalorder %s55, %s56
      %p68 = scmp.eq.s32.totalorder %s25, 1
      %p69 = por %p67, %p68
      %p71 = scmp.ne.s32.totalorder %s56, %s70
      %p72 = scmp.eq.s32.totalorder %s25, 0
      %p73 = por %p71, %p72
      %s75 = sadd.s32 %s74, 1
      %p78 = scmp.eq.s32.totalorder %s19, 1
      %p79 = scmp.ne.s32.totalorder %s74, %s76
      %p80 = scmp.eq.s32.totalorder %s19, 0
      %p81 = por %p79, %p80
      %p82 = scmp.ne.s32.totalorder %s74, %s76
      %p83 = scmp.eq.s32.totalorder %s24, 1
      %p84 = por %p82, %p83
      %p85 = scmp.ne.s32.totalorder %s76, %s77
      %p86 = scmp.eq.s32.totalorder %s24, 0
      %p87 = por %p85, %p86
      %p88 = scmp.ne.s32.totalorder %s76, %s77
      %p89 = scmp.eq.s32.totalorder %s25, 1
      %p90 = por %p88, %p89
      %p92 = scmp.ne.s32.totalorder %s77, %s91
      %p93 = scmp.eq.s32.totalorder %s25, 0
      %p94 = por %p92, %p93
      %s96 = sadd.s32 %s95, 1
      %p99 = scmp.eq.s32.totalorder %s19, 1
      %p100 = scmp.ne.s32.totalorder %s95, %s97
      %p101 = scmp.eq.s32.totalorder %s19, 0
      %p102 = por %p100, %p101
      %p103 = scmp.ne.s32.totalorder %s95, %s97
      %p104 = scmp.eq.s32.totalorder %s24, 1
      %p105 = por %p103, %p104
      %p106 = scmp.ne.s32.totalorder %s97, %s98
      %p107 = scmp.eq.s32.totalorder %s24, 0
      %p108 = por %p106, %p107
      %p109 = scmp.ne.s32.totalorder %s97, %s98
      %p110 = scmp.eq.s32.totalorder %s25, 1
      %p111 = por %p109, %p110
      %p113 = scmp.ne.s32.totalorder %s98, %s112
      %p114 = scmp.eq.s32.totalorder %s25, 0
      %p115 = por %p113, %p114
      %s117 = sadd.s32 %s116, 1
      %p120 = scmp.eq.s32.totalorder %s19, 1
      %p121 = scmp.ne.s32.totalorder %s116, %s118
      %p122 = scmp.eq.s32.totalorder %s19, 0
      %p123 = por %p121, %p122
      %p124 = scmp.ne.s32.totalorder %s116, %s118
      %p125 = scmp.eq.s32.totalorder %s24, 1
      %p126 = por %p124, %p125
      %p127 = scmp.ne.s32.totalorder %s118, %s119
      %p128 = scmp.eq.s32.totalorder %s24, 0
      %p129 = por %p127, %p128
      %p130 = scmp.ne.s32.totalorder %s118, %s119
      %p131 = scmp.eq.s32.totalorder %s25, 1
      %p132 = por %p130, %p131
      %p134 = scmp.ne.s32.totalorder %s119, %s133
      %p135 = scmp.eq.s32.totalorder %s25, 0
      %p136 = por %p134, %p135
      %s138 = sadd.s32 %s137, 1
      %p141 = scmp.eq.s32.totalorder %s19, 1
      %p142 = scmp.ne.s32.totalorder %s137, %s139
      %p143 = scmp.eq.s32.totalorder %s19, 0
      %p144 = por %p142, %p143
      %p145 = scmp.ne.s32.totalorder %s137, %s139
      %p146 = scmp.eq.s32.totalorder %s24, 1
      %p147 = por %p145, %p146
      %p148 = scmp.ne.s32.totalorder %s139, %s140
      %p149 = scmp.eq.s32.totalorder %s24, 0
      %p150 = por %p148, %p149
      %p151 = scmp.ne.s32.totalorder %s139, %s140
      %p152 = scmp.eq.s32.totalorder %s25, 1
      %p153 = por %p151, %p152
      %p155 = scmp.ne.s32.totalorder %s140, %s154
      %p156 = scmp.eq.s32.totalorder %s25, 0
      %p157 = por %p155, %p156
      %s159 = sadd.s32 %s158, 1
      %p162 = scmp.eq.s32.totalorder %s19, 1
      %p163 = scmp.ne.s32.totalorder %s158, %s160
      %p164 = scmp.eq.s32.totalorder %s19, 0
      %p165 = por %p163, %p164
      %p166 = scmp.ne.s32.totalorder %s158, %s160
      %p167 = scmp.eq.s32.totalorder %s24, 1
      %p168 = por %p166, %p167
      %p169 = scmp.ne.s32.totalorder %s160, %s161
      %p170 = scmp.eq.s32.totalorder %s24, 0
      %p171 = por %p169, %p170
      %p172 = scmp.ne.s32.totalorder %s160, %s161
      %p173 = scmp.eq.s32.totalorder %s25, 1
      %p174 = por %p172, %p173
      %p176 = scmp.ne.s32.totalorder %s161, %s175
      %p177 = scmp.eq.s32.totalorder %s25, 0
      %p178 = por %p176, %p177
      %s179 = ssub.s32 %s19, %s26
      %p180 = scmp.eq.s32.totalorder %s179, 0
      %s182 = sadd.s32 %s181, 1
      %s183 = scalar_select %p180, %s181, %s182
      %p186 = pneg %p180
      %p187 = scmp.eq.s32.totalorder %s19, 1
      %p188 = por %p186, %p187
      %p189 = scmp.ne.s32.totalorder %s181, %s184
      %p190 = scmp.eq.s32.totalorder %s19, 0
      %p191 = por %p189, %p190
      %p192 = scmp.ne.s32.totalorder %s181, %s184
      %p193 = scmp.eq.s32.totalorder %s24, 1
      %p194 = por %p192, %p193
      %p195 = scmp.ne.s32.totalorder %s184, %s185
      %p196 = scmp.eq.s32.totalorder %s24, 0
      %p197 = por %p195, %p196
      %p198 = scmp.ne.s32.totalorder %s184, %s185
      %p199 = scmp.eq.s32.totalorder %s25, 1
      %p200 = por %p198, %p199
      %p202 = scmp.ne.s32.totalorder %s185, %s201
      %p203 = scmp.eq.s32.totalorder %s25, 0
      %p204 = por %p202, %p203
      %p205 = scmp.le.s32.totalorder 1, %s19
      %p206 = scmp.lt.s32.totalorder %s19, 3
      %p207 = pnand %p205, %p206
      %p208 = pneg %p207
      // Predicated region
      $region9: #{tpu_custom_call.1} parent=5 // pred_check
        _
      $region10: #{tpu_custom_call.1} parent=5 // pred_check_branch
        %210 = sbr.rel (%p207) target = $region12
      $region11: #{tpu_custom_call.1} parent=5 // pred_region
        %s211 = ssub.s32 %s19, 1
        // Predicated region
        $region13: #{tpu_custom_call.1} parent=11 // pred_check
          %p212 = pneg %p66
        $region14: #{tpu_custom_call.1} parent=11 // pred_check_branch
          %214 = sbr.rel (%p212) target = $region16
        $region15: #{tpu_custom_call.1} parent=11 // pred_region
          _
        $region16: #{tpu_custom_call.1} parent=11 // pred_fallthru
          _
        // Predicated region
        $region17: #{tpu_custom_call.1} parent=11 // pred_check
          %p215 = pneg %p87
        $region18: #{tpu_custom_call.1} parent=11 // pred_check_branch
          %217 = sbr.rel (%p215) target = $region20
        $region19: #{tpu_custom_call.1} parent=11 // pred_region
          _
        $region20: #{tpu_custom_call.1} parent=11 // pred_fallthru
          _
        // Predicated region
        $region21: #{tpu_custom_call.1} parent=11 // pred_check
          %p218 = pneg %p108
        $region22: #{tpu_custom_call.1} parent=11 // pred_check_branch
          %220 = sbr.rel (%p218) target = $region24
        $region23: #{tpu_custom_call.1} parent=11 // pred_region
          _
        $region24: #{tpu_custom_call.1} parent=11 // pred_fallthru
          _
        // Predicated region
        $region25: #{tpu_custom_call.1} parent=11 // pred_check
          %p221 = pneg %p129
        $region26: #{tpu_custom_call.1} parent=11 // pred_check_branch
          %223 = sbr.rel (%p221) target = $region28
        $region27: #{tpu_custom_call.1} parent=11 // pred_region
          _
        $region28: #{tpu_custom_call.1} parent=11 // pred_fallthru
          _
        // Predicated region
        $region29: #{tpu_custom_call.1} parent=11 // pred_check
          %p224 = pneg %p150
        $region30: #{tpu_custom_call.1} parent=11 // pred_check_branch
          %226 = sbr.rel (%p224) target = $region32
        $region31: #{tpu_custom_call.1} parent=11 // pred_region
          _
        $region32: #{tpu_custom_call.1} parent=11 // pred_fallthru
          _
        // Predicated region
        $region33: #{tpu_custom_call.1} parent=11 // pred_check
          %p227 = pneg %p171
        $region34: #{tpu_custom_call.1} parent=11 // pred_check_branch
          %229 = sbr.rel (%p227) target = $region36
        $region35: #{tpu_custom_call.1} parent=11 // pred_region
          _
        $region36: #{tpu_custom_call.1} parent=11 // pred_fallthru
          _
      $region12: #{tpu_custom_call.1} parent=5 // pred_fallthru
        _
      %p230 = scmp.lt.s32.totalorder %s19, 2
      // Predicated region
      $region37: #{tpu_custom_call.1} parent=5 // pred_check
        %p231 = pneg %p230
      $region38: #{tpu_custom_call.1} parent=5 // pred_check_branch
        %233 = sbr.rel (%p231) target = $region40
      $region39: #{tpu_custom_call.1} parent=5 // pred_region
        // Predicated region
        $region41: #{tpu_custom_call.1} parent=39 // pred_check
          %p234 = pneg %p39
        $region42: #{tpu_custom_call.1} parent=39 // pred_check_branch
          %236 = sbr.rel (%p234) target = $region44
        $region43: #{tpu_custom_call.1} parent=39 // pred_region
          %s237 = sand.u32 %s29, 1
          %s238 = scalar_lea.sflag [#allocation4], %s237
          %s239 = sand.u32 %s29, 1
          %s240 = smul.addr %s239, 128
          %s241 = scalar_lea.vmem [#allocation3], %s240
          %s243 = ssub.s32 2048, 2048
          %244 = vsyncadd %s238, %s243
          %s245 = smul.addr %s19, 16
          %s246 = smul.addr %s245, 128
          %s247 = scalar_lea.hbm %s0, %s246
          %s248 = sshll.u32 %s241, 4
          %s249 = int_to_ptr.vmem [resolvable:$true] %s248
          %254 = dma.hbm_to_vmem [thread:$0]  %s247, 2048, %s249, %s238, 256, 256, 16
        $region44: #{tpu_custom_call.1} parent=39 // pred_fallthru
          _
      $region40: #{tpu_custom_call.1} parent=5 // pred_fallthru
        _
      %p255 = scmp.le.s32.totalorder 1, %s19
      %p256 = scmp.lt.s32.totalorder %s19, 3
      %p257 = pnand %p255, %p256
      %p258 = pneg %p257
      // Predicated region
      $region45: #{tpu_custom_call.1} parent=5 // pred_check
        _
      $region46: #{tpu_custom_call.1} parent=5 // pred_check_branch
        %260 = sbr.rel (%p257) target = $region48
      $region47: #{tpu_custom_call.1} parent=5 // pred_region
        %s261 = ssub.s32 %s19, 1
        %s262 = sand.u32 %s32, 1
        %s263 = scalar_lea.sflag [#allocation4], %s262
        %s264 = sand.u32 %s32, 1
        %s265 = smul.addr %s264, 128
        %s266 = scalar_lea.vmem [#allocation3], %s265
        // Predicated region
        $region49: #{tpu_custom_call.1} parent=47 // pred_check
          %p267 = pneg %p45
        $region50: #{tpu_custom_call.1} parent=47 // pred_check_branch
          %269 = sbr.rel (%p267) target = $region52
        $region51: #{tpu_custom_call.1} parent=47 // pred_region
          %270 = dma.done %s263, 2048
        $region52: #{tpu_custom_call.1} parent=47 // pred_fallthru
          _
        %s271 = sand.u32 %s32, 1
        %s272 = scalar_lea.sflag [#allocation4], %s271
        %s273 = sand.u32 %s32, 1
        %s274 = smul.addr %s273, 128
        %s275 = scalar_lea.vmem [#allocation3], %s274
        %p276 = pneg %p45
        %p277 = pneg %p42
        %p278 = pneg %p66
        %p279 = pneg %p63
        %p280 = pneg %p87
        %p281 = pneg %p84
        %p282 = pneg %p108
        %p283 = pneg %p105
        %p284 = pneg %p129
        %p285 = pneg %p126
        %p286 = pneg %p150
        %p287 = pneg %p147
        %p288 = pneg %p171
        %p289 = pneg %p168
        %p290 = pneg %p197
        %p291 = pneg %p194
        %s292 = sand.u32 %s184, 1
        %s293 = scalar_lea.sflag [#allocation5], %s292
        %s294 = sand.u32 %s184, 1
        %s295 = smul.addr %s294, 128
        %s296 = scalar_lea.vmem [#allocation6], %s295
        %v297 = vld [vmem:[%s266] sm:$0xff]
        %v298 = vld [vmem:[%s266 + $0x8] sm:$0xff]
        %v299 = vld [vmem:[%s266 + $0x10] sm:$0xff]
        %v300 = vld [vmem:[%s266 + $0x18] sm:$0xff]
        %v301 = vld [vmem:[%s266 + $0x20] sm:$0xff]
        %v302 = vld [vmem:[%s266 + $0x28] sm:$0xff]
        %v303 = vld [vmem:[%s266 + $0x30] sm:$0xff]
        %v304 = vld [vmem:[%s266 + $0x38] sm:$0xff]
        %v305 = vld [vmem:[%s266 + $0x40] sm:$0xff]
        %v306 = vld [vmem:[%s266 + $0x48] sm:$0xff]
        %v307 = vld [vmem:[%s266 + $0x50] sm:$0xff]
        %v308 = vld [vmem:[%s266 + $0x58] sm:$0xff]
        %v309 = vld [vmem:[%s266 + $0x60] sm:$0xff]
        %v310 = vld [vmem:[%s266 + $0x68] sm:$0xff]
        %v311 = vld [vmem:[%s266 + $0x70] sm:$0xff]
        %v312 = vld [vmem:[%s266 + $0x78] sm:$0xff]
        %v313 = vadd.f32 %v297, %v298
        %314 = vadd.xlane.f32.xlu0 %v313
        %v315 = vpop.xlane.xlu0 %314
        %v316 = vadd.f32 %v299, %v300
        %317 = vadd.xlane.f32.xlu0 %v316
        %v318 = vpop.xlane.xlu0 %317
        %v319 = vadd.f32 %v301, %v302
        %320 = vadd.xlane.f32.xlu0 %v319
        %v321 = vpop.xlane.xlu0 %320
        %v322 = vadd.f32 %v303, %v304
        %323 = vadd.xlane.f32.xlu0 %v322
        %v324 = vpop.xlane.xlu0 %323
        %v325 = vadd.f32 %v305, %v306
        %326 = vadd.xlane.f32.xlu0 %v325
        %v327 = vpop.xlane.xlu0 %326
        %v328 = vadd.f32 %v307, %v308
        %329 = vadd.xlane.f32.xlu0 %v328
        %v330 = vpop.xlane.xlu0 %329
        %v331 = vadd.f32 %v309, %v310
        %332 = vadd.xlane.f32.xlu0 %v331
        %v333 = vpop.xlane.xlu0 %332
        %v334 = vadd.f32 %v311, %v312
        %335 = vadd.xlane.f32.xlu0 %v334
        %v336 = vpop.xlane.xlu0 %335
        %v337 = vmul.f32 %v315, 0.00390625
        %v338 = vmul.f32 %v318, 0.00390625
        %v339 = vmul.f32 %v321, 0.00390625
        %v340 = vmul.f32 %v324, 0.00390625
        %v341 = vmul.f32 %v327, 0.00390625
        %v342 = vmul.f32 %v330, 0.00390625
        %v343 = vmul.f32 %v333, 0.00390625
        %v344 = vmul.f32 %v336, 0.00390625
        %v345 = vld [vmem:[%s1] sm:$0xff]
        %v346 = vld [vmem:[%s1 + $0x8] sm:$0xff]
        %v347 = vld [vmem:[%s1 + $0x10] sm:$0xff]
        %v348 = vld [vmem:[%s1 + $0x18] sm:$0xff]
        %v349 = vld [vmem:[%s1 + $0x20] sm:$0xff]
        %v350 = vld [vmem:[%s1 + $0x28] sm:$0xff]
        %v351 = vld [vmem:[%s1 + $0x30] sm:$0xff]
        %v352 = vld [vmem:[%s1 + $0x38] sm:$0xff]
        %v353 = vld [vmem:[%s2] sm:$0x1]
        %v362 = vlaneseq
        %v363 = vand.u32 %v362, 127
        %v364 = vlaneseq
        %v365 = vshrl.u32 %v364, 7
        %v366 = vsub.s32 %v363, %v365
        %v367 = vrot.slane %v337, %v366
        %v368 = vadd.s32 %v363, 4294967288
        %v369 = vlaneseq
        %v370 = vshrl.u32 %v369, 7
        %v371 = vsub.s32 %v368, %v370
        %v372 = vrot.slane %v338, %v371
        %vm373 = vcmask 130112
        %v374 = vsel %vm373, %v372, %v367
        %v375 = vadd.s32 %v363, 4294967280
        %v376 = vlaneseq
        %v377 = vshrl.u32 %v376, 7
        %v378 = vsub.s32 %v375, %v377
        %v379 = vrot.slane %v339, %v378
        %vm380 = vcmask 195712
        %v381 = vsel %vm380, %v379, %v374
        %v382 = vadd.s32 %v363, 4294967272
        %v383 = vlaneseq
        %v384 = vshrl.u32 %v383, 7
        %v385 = vsub.s32 %v382, %v384
        %v386 = vrot.slane %v340, %v385
        %vm387 = vcmask 261312
        %v388 = vsel %vm387, %v386, %v381
        %v389 = vadd.s32 %v363, 4294967264
        %v390 = vlaneseq
        %v391 = vshrl.u32 %v390, 7
        %v392 = vsub.s32 %v389, %v391
        %v393 = vrot.slane %v341, %v392
        %vm394 = vcmask 326912
        %v395 = vsel %vm394, %v393, %v388
        %v396 = vadd.s32 %v363, 4294967256
        %v397 = vlaneseq
        %v398 = vshrl.u32 %v397, 7
        %v399 = vsub.s32 %v396, %v398
        %v400 = vrot.slane %v342, %v399
        %vm401 = vcmask 392512
        %v402 = vsel %vm401, %v400, %v395
        %v403 = vadd.s32 %v363, 4294967248
        %v404 = vlaneseq
        %v405 = vshrl.u32 %v404, 7
        %v406 = vsub.s32 %v403, %v405
        %v407 = vrot.slane %v343, %v406
        %vm408 = vcmask 458112
        %v409 = vsel %vm408, %v407, %v402
        %v410 = vadd.s32 %v363, 4294967240
        %v411 = vlaneseq
        %v412 = vshrl.u32 %v411, 7
        %v413 = vsub.s32 %v410, %v412
        %v414 = vrot.slane %v344, %v413
        %vm415 = vcmask 523712
        %v416 = vsel %vm415, %v414, %v409
        %vm417 = vcmask 523264
        %v418 = vsel %vm417, %v416, 0
        %420 = vmatprep.subr.mxu0 0.0
        %421 = vmatpush1.msra.mxu0 %v345
        %422 = vmatprep.subr.mxu0 0.0
        %423 = vmatpush1.msra.mxu0 %v346
        %424 = vmatprep.subr.mxu0 0.0
        %425 = vmatpush1.msra.mxu0 %v347
        %426 = vmatprep.subr.mxu0 0.0
        %427 = vmatpush1.msra.mxu0 %v348
        %428 = vmatprep.subr.mxu0 0.0
        %429 = vmatpush1.msra.mxu0 %v349
        %430 = vmatprep.subr.mxu0 0.0
        %431 = vmatpush1.msra.mxu0 %v350
        %432 = vmatprep.subr.mxu0 0.0
        %433 = vmatpush1.msra.mxu0 %v351
        %434 = vmatprep.subr.mxu0 0.0
        %435 = vmatpush1.msra.mxu0 %v352
        %436 = vmatprep.subr.mxu0 0.0
        %437 = vmatpush1.msra.mxu0 0.0
        %438 = vmatprep.subr.mxu0 0.0
        %439 = vmatpush1.msra.mxu0 0.0
        %440 = vmatprep.subr.mxu0 0.0
        %441 = vmatpush1.msra.mxu0 0.0
        %442 = vmatprep.subr.mxu0 0.0
        %443 = vmatpush1.msra.mxu0 0.0
        %444 = vmatprep.subr.mxu0 0.0
        %445 = vmatpush1.msra.mxu0 0.0
        %446 = vmatprep.subr.mxu0 0.0
        %447 = vmatpush1.msra.mxu0 0.0
        %448 = vmatprep.subr.mxu0 0.0
        %449 = vmatpush1.msra.mxu0 0.0
        %450 = vmatprep.subr.mxu0 0.0
        %451 = vmatpush1.msra.mxu0 0.0
        %452 = vmatprep.subr.mxu0 0.0
        %453 = vmatpush1.msra.mxu0 0.0
        %454 = vmatprep.subr.mxu0 0.0
        %455 = vmatpush1.msra.mxu0 0.0
        %456 = vmatprep.subr.mxu0 0.0
        %457 = vmatpush1.msra.mxu0 0.0
        %458 = vmatprep.subr.mxu0 0.0
        %459 = vmatpush1.msra.mxu0 0.0
        %460 = vmatprep.subr.mxu0 0.0
        %461 = vmatpush1.msra.mxu0 0.0
        %462 = vmatprep.subr.mxu0 0.0
        %463 = vmatpush1.msra.mxu0 0.0
        %464 = vmatprep.subr.mxu0 0.0
        %465 = vmatpush1.msra.mxu0 0.0
        %466 = vmatprep.subr.mxu0 0.0
        %467 = vmatpush1.msra.mxu0 0.0
        %468 = vmatprep.subr.mxu0 0.0
        %469 = vmatpush1.msra.mxu0 0.0
        %470 = vmatprep.subr.mxu0 0.0
        %471 = vmatpush1.msra.mxu0 0.0
        %472 = vmatprep.subr.mxu0 0.0
        %473 = vmatpush1.msra.mxu0 0.0
        %474 = vmatprep.subr.mxu0 0.0
        %475 = vmatpush1.msra.mxu0 0.0
        %476 = vmatprep.subr.mxu0 0.0
        %477 = vmatpush1.msra.mxu0 0.0
        %478 = vmatprep.subr.mxu0 0.0
        %479 = vmatpush1.msra.mxu0 0.0
        %480 = vmatprep.subr.mxu0 0.0
        %481 = vmatpush1.msra.mxu0 0.0
        %482 = vmatprep.subr.mxu0 0.0
        %483 = vmatpush1.msra.mxu0 0.0
        %484 = vmatprep.mubr.f32.mxu0 0.0
        %485 = vmatmul.mubr.f32.gmra.mrb[0].mxu0 %v418
        %v486 = vpop.f32.mrb[0].mxu0
        %v487 = vadd.f32 %v353, %v486
        %v488 = vpop.f32.mrb[0].mxu0
        %489 = vdwg.mxu0
        %v490 = vmax.f32 %v487, 0.0
        %v491 = vld [vmem:[%s3] sm:$0xff]
        %v492 = vld [vmem:[%s3 + $0x8] sm:$0xff]
        %v493 = vld [vmem:[%s3 + $0x10] sm:$0xff]
        %v494 = vld [vmem:[%s3 + $0x18] sm:$0xff]
        %v495 = vld [vmem:[%s4] sm:$0x1]
        %vm496 = vcmask 261120
        %v498 = vsel %vm496, %v490, 0
        %500 = vmatprep.subr.mxu0 0.0
        %501 = vmatpush1.msra.mxu0 %v491
        %502 = vmatprep.subr.mxu0 0.0
        %503 = vmatpush1.msra.mxu0 %v492
        %504 = vmatprep.subr.mxu0 0.0
        %505 = vmatpush1.msra.mxu0 %v493
        %506 = vmatprep.subr.mxu0 0.0
        %507 = vmatpush1.msra.mxu0 %v494
        %508 = vmatprep.subr.mxu0 0.0
        %509 = vmatpush1.msra.mxu0 0.0
        %510 = vmatprep.subr.mxu0 0.0
        %511 = vmatpush1.msra.mxu0 0.0
        %512 = vmatprep.subr.mxu0 0.0
        %513 = vmatpush1.msra.mxu0 0.0
        %514 = vmatprep.subr.mxu0 0.0
        %515 = vmatpush1.msra.mxu0 0.0
        %516 = vmatprep.subr.mxu0 0.0
        %517 = vmatpush1.msra.mxu0 0.0
        %518 = vmatprep.subr.mxu0 0.0
        %519 = vmatpush1.msra.mxu0 0.0
        %520 = vmatprep.subr.mxu0 0.0
        %521 = vmatpush1.msra.mxu0 0.0
        %522 = vmatprep.subr.mxu0 0.0
        %523 = vmatpush1.msra.mxu0 0.0
        %524 = vmatprep.subr.mxu0 0.0
        %525 = vmatpush1.msra.mxu0 0.0
        %526 = vmatprep.subr.mxu0 0.0
        %527 = vmatpush1.msra.mxu0 0.0
        %528 = vmatprep.subr.mxu0 0.0
        %529 = vmatpush1.msra.mxu0 0.0
        %530 = vmatprep.subr.mxu0 0.0
        %531 = vmatpush1.msra.mxu0 0.0
        %532 = vmatprep.subr.mxu0 0.0
        %533 = vmatpush1.msra.mxu0 0.0
        %534 = vmatprep.subr.mxu0 0.0
        %535 = vmatpush1.msra.mxu0 0.0
        %536 = vmatprep.subr.mxu0 0.0
        %537 = vmatpush1.msra.mxu0 0.0
        %538 = vmatprep.subr.mxu0 0.0
        %539 = vmatpush1.msra.mxu0 0.0
        %540 = vmatprep.subr.mxu0 0.0
        %541 = vmatpush1.msra.mxu0 0.0
        %542 = vmatprep.subr.mxu0 0.0
        %543 = vmatpush1.msra.mxu0 0.0
        %544 = vmatprep.subr.mxu0 0.0
        %545 = vmatpush1.msra.mxu0 0.0
        %546 = vmatprep.subr.mxu0 0.0
        %547 = vmatpush1.msra.mxu0 0.0
        %548 = vmatprep.subr.mxu0 0.0
        %549 = vmatpush1.msra.mxu0 0.0
        %550 = vmatprep.subr.mxu0 0.0
        %551 = vmatpush1.msra.mxu0 0.0
        %552 = vmatprep.subr.mxu0 0.0
        %553 = vmatpush1.msra.mxu0 0.0
        %554 = vmatprep.subr.mxu0 0.0
        %555 = vmatpush1.msra.mxu0 0.0
        %556 = vmatprep.subr.mxu0 0.0
        %557 = vmatpush1.msra.mxu0 0.0
        %558 = vmatprep.subr.mxu0 0.0
        %559 = vmatpush1.msra.mxu0 0.0
        %560 = vmatprep.subr.mxu0 0.0
        %561 = vmatpush1.msra.mxu0 0.0
        %562 = vmatprep.subr.mxu0 0.0
        %563 = vmatpush1.msra.mxu0 0.0
        %564 = vmatprep.mubr.f32.mxu0 0.0
        %565 = vmatmul.mubr.f32.gmra.mrb[0].mxu0 %v498
        %v566 = vpop.f32.mrb[0].mxu0
        %v567 = vadd.f32 %v495, %v566
        %v568 = vpop.f32.mrb[0].mxu0
        %569 = vdwg.mxu0
        %v570 = vsub.f32 0.0, %v567
        %v571 = vmul.f32 %v570, 1.442695
        %v572 = vpow.pop %v571
        %v573 = vadd.f32 %v572, 1.0
        %v574 = vrcp.pop %v573
        %v575 = vmul.f32 1.0, %v574
        %v576 = vadd.f32 %v575, 1.0
        %vm577 = vcmask 516096
        %578 = vst.msk [vmem:[#allocation2] sm:$0x1] %vm577, %v576
        %v579 = vld [vmem:[#allocation2] sm:$0x1]
        %v580 = vld [vmem:[%s5] sm:$0xff]
        %v581 = vld [vmem:[%s5 + $0x8] sm:$0xff]
        %v582 = vld [vmem:[%s5 + $0x10] sm:$0xff]
        %v583 = vld [vmem:[%s5 + $0x18] sm:$0xff]
        %v584 = vld [vmem:[%s5 + $0x20] sm:$0xff]
        %v585 = vld [vmem:[%s5 + $0x28] sm:$0xff]
        %v586 = vld [vmem:[%s5 + $0x30] sm:$0xff]
        %v587 = vld [vmem:[%s5 + $0x38] sm:$0xff]
        %v589 = vlaneseq
        %v590 = vshrl.u32 %v589, 7
        %v591 = vsub.s32 0, %v590
        %v592 = vrot.slane %v579, %v591
        %v594 = vmul.f32 %v580, %v592
        %v595 = vmul.f32 %v581, %v592
        %v596 = vmul.f32 %v582, %v592
        %v597 = vmul.f32 %v583, %v592
        %v598 = vmul.f32 %v584, %v592
        %v599 = vmul.f32 %v585, %v592
        %v600 = vmul.f32 %v586, %v592
        %v601 = vmul.f32 %v587, %v592
        %v602 = vld [vmem:[%s266] sm:$0xff]
        %v603 = vld [vmem:[%s266 + $0x8] sm:$0xff]
        %v604 = vld [vmem:[%s266 + $0x10] sm:$0xff]
        %v605 = vld [vmem:[%s266 + $0x18] sm:$0xff]
        %v606 = vld [vmem:[%s266 + $0x20] sm:$0xff]
        %v607 = vld [vmem:[%s266 + $0x28] sm:$0xff]
        %v608 = vld [vmem:[%s266 + $0x30] sm:$0xff]
        %v609 = vld [vmem:[%s266 + $0x38] sm:$0xff]
        %v610 = vld [vmem:[%s266 + $0x40] sm:$0xff]
        %v611 = vld [vmem:[%s266 + $0x48] sm:$0xff]
        %v612 = vld [vmem:[%s266 + $0x50] sm:$0xff]
        %v613 = vld [vmem:[%s266 + $0x58] sm:$0xff]
        %v614 = vld [vmem:[%s266 + $0x60] sm:$0xff]
        %v615 = vld [vmem:[%s266 + $0x68] sm:$0xff]
        %v616 = vld [vmem:[%s266 + $0x70] sm:$0xff]
        %v617 = vld [vmem:[%s266 + $0x78] sm:$0xff]
        %v618 = vld [vmem:[%s6] sm:$0xff]
        %v619 = vld [vmem:[%s6 + $0x8] sm:$0xff]
        %v620 = vld [vmem:[%s6 + $0x10] sm:$0xff]
        %v621 = vld [vmem:[%s6 + $0x18] sm:$0xff]
        %v622 = vld [vmem:[%s6 + $0x20] sm:$0xff]
        %v623 = vld [vmem:[%s6 + $0x28] sm:$0xff]
        %v624 = vld [vmem:[%s6 + $0x30] sm:$0xff]
        %v625 = vld [vmem:[%s6 + $0x38] sm:$0xff]
        %627 = vset.pattern.permute.xlu0 0
        %628 = vperm.xlu0 %627, %v618
        %v629 = vpop.permute.xlu0 %628
        %632 = vset.pattern.permute.xlu0 0
        %633 = vperm.xlu0 %632, %v619
        %v634 = vpop.permute.xlu0 %633
        %637 = vset.pattern.permute.xlu0 0
        %638 = vperm.xlu0 %637, %v620
        %v639 = vpop.permute.xlu0 %638
        %642 = vset.pattern.permute.xlu0 0
        %643 = vperm.xlu0 %642, %v621
        %v644 = vpop.permute.xlu0 %643
        %647 = vset.pattern.permute.xlu0 0
        %648 = vperm.xlu0 %647, %v622
        %v649 = vpop.permute.xlu0 %648
        %652 = vset.pattern.permute.xlu0 0
        %653 = vperm.xlu0 %652, %v623
        %v654 = vpop.permute.xlu0 %653
        %657 = vset.pattern.permute.xlu0 0
        %658 = vperm.xlu0 %657, %v624
        %v659 = vpop.permute.xlu0 %658
        %662 = vset.pattern.permute.xlu0 0
        %663 = vperm.xlu0 %662, %v625
        %v664 = vpop.permute.xlu0 %663
        %v667 = vsel %vm417, %v594, 0
        %v670 = vsel %vm417, %v595, 0
        %v673 = vsel %vm417, %v596, 0
        %v676 = vsel %vm417, %v597, 0
        %v679 = vsel %vm417, %v598, 0
        %v682 = vsel %vm417, %v599, 0
        %v685 = vsel %vm417, %v600, 0
        %v688 = vsel %vm417, %v601, 0
        %690 = vmatprep.subr.mxu0 %v603
        %691 = vmatpush1.msra.mxu0 %v602
        %692 = vmatprep.subr.mxu0 %v605
        %693 = vmatpush1.msra.mxu0 %v604
        %694 = vmatprep.subr.mxu0 %v607
        %695 = vmatpush1.msra.mxu0 %v606
        %696 = vmatprep.subr.mxu0 %v609
        %697 = vmatpush1.msra.mxu0 %v608
        %698 = vmatprep.subr.mxu0 %v611
        %699 = vmatpush1.msra.mxu0 %v610
        %700 = vmatprep.subr.mxu0 %v613
        %701 = vmatpush1.msra.mxu0 %v612
        %702 = vmatprep.subr.mxu0 %v615
        %703 = vmatpush1.msra.mxu0 %v614
        %704 = vmatprep.subr.mxu0 %v617
        %705 = vmatpush1.msra.mxu0 %v616
        %706 = vmatprep.subr.mxu0 0.0
        %707 = vmatpush1.msra.mxu0 0.0
        %708 = vmatprep.subr.mxu0 0.0
        %709 = vmatpush1.msra.mxu0 0.0
        %710 = vmatprep.subr.mxu0 0.0
        %711 = vmatpush1.msra.mxu0 0.0
        %712 = vmatprep.subr.mxu0 0.0
        %713 = vmatpush1.msra.mxu0 0.0
        %714 = vmatprep.subr.mxu0 0.0
        %715 = vmatpush1.msra.mxu0 0.0
        %716 = vmatprep.subr.mxu0 0.0
        %717 = vmatpush1.msra.mxu0 0.0
        %718 = vmatprep.subr.mxu0 0.0
        %719 = vmatpush1.msra.mxu0 0.0
        %720 = vmatprep.subr.mxu0 0.0
        %721 = vmatpush1.msra.mxu0 0.0
        %722 = vmatprep.subr.mxu0 0.0
        %723 = vmatpush1.msra.mxu0 0.0
        %724 = vmatprep.subr.mxu0 0.0
        %725 = vmatpush1.msra.mxu0 0.0
        %726 = vmatprep.subr.mxu0 0.0
        %727 = vmatpush1.msra.mxu0 0.0
        %728 = vmatprep.subr.mxu0 0.0
        %729 = vmatpush1.msra.mxu0 0.0
        %730 = vmatprep.subr.mxu0 0.0
        %731 = vmatpush1.msra.mxu0 0.0
        %732 = vmatprep.subr.mxu0 0.0
        %733 = vmatpush1.msra.mxu0 0.0
        %734 = vmatprep.subr.mxu0 0.0
        %735 = vmatpush1.msra.mxu0 0.0
        %736 = vmatprep.subr.mxu0 0.0
        %737 = vmatpush1.msra.mxu0 0.0
        %738 = vmatprep.subr.mxu0 0.0
        %739 = vmatpush1.msra.mxu0 0.0
        %740 = vmatprep.subr.mxu0 0.0
        %741 = vmatpush1.msra.mxu0 0.0
        %742 = vmatprep.subr.mxu0 0.0
        %743 = vmatpush1.msra.mxu0 0.0
        %744 = vmatprep.subr.mxu0 0.0
        %745 = vmatpush1.msra.mxu0 0.0
        %746 = vmatprep.subr.mxu0 0.0
        %747 = vmatpush1.msra.mxu0 0.0
        %748 = vmatprep.subr.mxu0 0.0
        %749 = vmatpush1.msra.mxu0 0.0
        %750 = vmatprep.subr.mxu0 0.0
        %751 = vmatpush1.msra.mxu0 0.0
        %752 = vmatprep.subr.mxu0 0.0
        %753 = vmatpush1.msra.mxu0 0.0
        %754 = vmatprep.mubr.f32.mxu0 0.0
        %755 = vmatmul.mubr.f32.gmra.mrb[0].mxu0 %v667
        %v756 = vpop.f32.mrb[0].mxu0
        %v757 = vadd.f32 %v629, %v756
        %v758 = vpop.f32.mrb[0].mxu0
        %v759 = vadd.f32 %v629, %v758
        %760 = vmatprep.mubr.f32.mxu0 0.0
        %761 = vmatmul.mubr.f32.gmra.mrb[0].mxu0 %v670
        %v762 = vpop.f32.mrb[0].mxu0
        %v763 = vadd.f32 %v634, %v762
        %v764 = vpop.f32.mrb[0].mxu0
        %v765 = vadd.f32 %v634, %v764
        %766 = vmatprep.mubr.f32.mxu0 0.0
        %767 = vmatmul.mubr.f32.gmra.mrb[0].mxu0 %v673
        %v768 = vpop.f32.mrb[0].mxu0
        %v769 = vadd.f32 %v639, %v768
        %v770 = vpop.f32.mrb[0].mxu0
        %v771 = vadd.f32 %v639, %v770
        %772 = vmatprep.mubr.f32.mxu0 0.0
        %773 = vmatmul.mubr.f32.gmra.mrb[0].mxu0 %v676
        %v774 = vpop.f32.mrb[0].mxu0
        %v775 = vadd.f32 %v644, %v774
        %v776 = vpop.f32.mrb[0].mxu0
        %v777 = vadd.f32 %v644, %v776
        %778 = vmatprep.mubr.f32.mxu0 0.0
        %779 = vmatmul.mubr.f32.gmra.mrb[0].mxu0 %v679
        %v780 = vpop.f32.mrb[0].mxu0
        %v781 = vadd.f32 %v649, %v780
        %v782 = vpop.f32.mrb[0].mxu0
        %v783 = vadd.f32 %v649, %v782
        %784 = vmatprep.mubr.f32.mxu0 0.0
        %785 = vmatmul.mubr.f32.gmra.mrb[0].mxu0 %v682
        %v786 = vpop.f32.mrb[0].mxu0
        %v787 = vadd.f32 %v654, %v786
        %v788 = vpop.f32.mrb[0].mxu0
        %v789 = vadd.f32 %v654, %v788
        %790 = vmatprep.mubr.f32.mxu0 0.0
        %791 = vmatmul.mubr.f32.gmra.mrb[0].mxu0 %v685
        %v792 = vpop.f32.mrb[0].mxu0
        %v793 = vadd.f32 %v659, %v792
        %v794 = vpop.f32.mrb[0].mxu0
        %v795 = vadd.f32 %v659, %v794
        %796 = vmatprep.mubr.f32.mxu0 0.0
        %797 = vmatmul.mubr.f32.gmra.mrb[0].mxu0 %v688
        %v798 = vpop.f32.mrb[0].mxu0
        %v799 = vadd.f32 %v664, %v798
        %v800 = vpop.f32.mrb[0].mxu0
        %v801 = vadd.f32 %v664, %v800
        %802 = vdwg.mxu0
        %803 = vst [vmem:[%s296] sm:$0xff] %v757
        %804 = vst [vmem:[%s296 + $0x8] sm:$0xff] %v759
        %805 = vst [vmem:[%s296 + $0x10] sm:$0xff] %v763
        %806 = vst [vmem:[%s296 + $0x18] sm:$0xff] %v765
        %807 = vst [vmem:[%s296 + $0x20] sm:$0xff] %v769
        %808 = vst [vmem:[%s296 + $0x28] sm:$0xff] %v771
        %809 = vst [vmem:[%s296 + $0x30] sm:$0xff] %v775
        %810 = vst [vmem:[%s296 + $0x38] sm:$0xff] %v777
        %811 = vst [vmem:[%s296 + $0x40] sm:$0xff] %v781
        %812 = vst [vmem:[%s296 + $0x48] sm:$0xff] %v783
        %813 = vst [vmem:[%s296 + $0x50] sm:$0xff] %v787
        %814 = vst [vmem:[%s296 + $0x58] sm:$0xff] %v789
        %815 = vst [vmem:[%s296 + $0x60] sm:$0xff] %v793
        %816 = vst [vmem:[%s296 + $0x68] sm:$0xff] %v795
        %817 = vst [vmem:[%s296 + $0x70] sm:$0xff] %v799
        %818 = vst [vmem:[%s296 + $0x78] sm:$0xff] %v801
        %s819 = sand.u32 %s184, 1
        %s820 = scalar_lea.sflag [#allocation5], %s819
        %s821 = sand.u32 %s184, 1
        %s822 = smul.addr %s821, 128
        %s823 = scalar_lea.vmem [#allocation6], %s822
        // Predicated region
        $region53: #{tpu_custom_call.1} parent=47 // pred_check
          %p824 = pneg %p194
        $region54: #{tpu_custom_call.1} parent=47 // pred_check_branch
          %826 = sbr.rel (%p824) target = $region56
        $region55: #{tpu_custom_call.1} parent=47 // pred_region
          %s828 = ssub.s32 2048, 2048
          %829 = vsyncadd %s820, %s828
          %s830 = smul.addr %s24, 16
          %s831 = smul.addr %s830, 128
          %s832 = scalar_lea.hbm %s7, %s831
          %s833 = sshll.u32 %s823, 4
          %s834 = int_to_ptr.vmem [resolvable:$true] %s833
          %839 = dma.vmem_to_hbm [thread:$0]  %s834, 2048, %s832, %s820, 256, 256, 16
        $region56: #{tpu_custom_call.1} parent=47 // pred_fallthru
          _
      $region48: #{tpu_custom_call.1} parent=5 // pred_fallthru
        _
      %p840 = scmp.le.s32.totalorder 2, %s19
      // Predicated region
      $region57: #{tpu_custom_call.1} parent=5 // pred_check
        %p841 = pneg %p840
      $region58: #{tpu_custom_call.1} parent=5 // pred_check_branch
        %843 = sbr.rel (%p841) target = $region60
      $region59: #{tpu_custom_call.1} parent=5 // pred_region
        %s844 = ssub.s32 %s19, 2
        // Predicated region
        $region61: #{tpu_custom_call.1} parent=59 // pred_check
          %p845 = pneg %p200
        $region62: #{tpu_custom_call.1} parent=59 // pred_check_branch
          %847 = sbr.rel (%p845) target = $region64
        $region63: #{tpu_custom_call.1} parent=59 // pred_region
          %s848 = sand.u32 %s185, 1
          %s849 = scalar_lea.sflag [#allocation5], %s848
          %s850 = sand.u32 %s185, 1
          %s851 = smul.addr %s850, 128
          %s852 = scalar_lea.vmem [#allocation6], %s851
          %853 = dma.done %s849, 2048
        $region64: #{tpu_custom_call.1} parent=59 // pred_fallthru
          _
      $region60: #{tpu_custom_call.1} parent=5 // pred_fallthru
        _
    $region6: #{tpu_custom_call.1} parent=1 // loop_footer
      %s23 = sadd.s32 1, %s19
    $region7: #{tpu_custom_call.1} parent=1 // loop_footer_branch
      %18 = sbr.rel target = $region3
    $region8: #{tpu_custom_call.1} parent=1 // loop_exit
      _
    %854 = vsyncpa [#allocation4], 1
    %s855 = scalar_lea.sflag [#allocation4], 1
    %856 = vsyncpa %s855, 1
    %857 = vsyncpa [#allocation5], 1
    %s858 = scalar_lea.sflag [#allocation5], 1
    %859 = vsyncpa %s858, 1

</llo_original>
